<compile_context>
chip_gen: v6e
topology: v6e:2x2x1
jax: 0.10.0
libtpu: 0.0.40
codegen_flags: <defaults>
</compile_context>

<pallas_src>
import functools

import numpy as np
import jax
import jax.numpy as jnp
from jax import lax
from jax.experimental import pallas as pl
from jax.experimental.pallas import tpu as pltpu


_NEG = -1e30  # max-semiring mask value (far below any reachable score)


def _span_margin_kernel(lengths_ref,                 # SMEM (B,)  int32, scalar prefetch
                        logits_ref,                  # VMEM (Ct, N, N)  class-chunk slab
                        labels_ref,                  # VMEM (N, N) int32
                        out_ref,                     # VMEM (8, 128) f32 per-batch loss block
                        m_ref, base_ref, gold_ref,   # VMEM (N, N) f32 class-fold accumulators
                        a_ref, bz_ref, rz_ref,       # VMEM (N, N) f32 CKY charts / sheared red
                        *, n, class_block, force_root_constituent):
    b = pl.program_id(0)
    c = pl.program_id(1)
    nc = pl.num_programs(1)

    length = lengths_ref[b]                          # scalar int32 (SMEM read)

    chunk = logits_ref[...].astype(jnp.float32)      # (Ct, N, N), cast per-block in VMEM
    lbl = labels_ref[...]                            # (N, N) int32
    gold = jnp.maximum(lbl, 0)                       # relu(labels): gold class ids

    @pl.when(c == 0)
    def _init():
        base_ref[...] = chunk[0]                     # logits[..., class 0] (chunk 0 holds it)
        m_ref[...] = jnp.full((n, n), _NEG, jnp.float32)
        gold_ref[...] = jnp.zeros((n, n), jnp.float32)

    # ---- fold this class chunk: elementwise over (N, N) slabs (no lane-axis class padding) ----
    cls = jax.lax.broadcasted_iota(jnp.int32, (class_block, n, n), 0) + c * class_block
    is_gold = cls == gold[None, :, :]
    aug = jnp.where(is_gold, 0.0, 1.0)               # 1 - one_hot(gold), fused (never materialized)
    if force_root_constituent:
        ii = jax.lax.broadcasted_iota(jnp.int32, (class_block, n, n), 1)
        jj = jax.lax.broadcasted_iota(jnp.int32, (class_block, n, n), 2)
        root = (ii == 0) & (jj == (length - 1)) & (cls == 0)
        aug = aug - jnp.where(root, 1e9, 0.0)
    m_ref[...] = jnp.maximum(m_ref[...], jnp.max(chunk + aug, axis=0))
    gold_ref[...] = gold_ref[...] + jnp.sum(jnp.where(is_gold, chunk, 0.0), axis=0)

    # ---- CKY (max semiring) once every class chunk has been folded in ----
    @pl.when(c == nc - 1)
    def _cky():
        lane = jax.lax.broadcasted_iota(jnp.int32, (n, n), 1)
        rows = jax.lax.broadcasted_iota(jnp.int32, (n, n), 0)

        # per-span potential of the augmented score, baseline-subtracted (class 0 slab)
        red = m_ref[...] - base_ref[...]             # (N, N)

        # Precompute the diagonal shear once: rz[i, s] = red[i, (i + s) mod n]
        # (row i circularly rotated left by i, built in log2(n) static-shift steps).
        rz_ref[...] = red
        for bit in range(max(1, (n - 1).bit_length())):
            sh = 1 << bit
            old = rz_ref[...]
            lo = rz_ref[:, 0:sh]
            hi = rz_ref[:, sh:n]
            rz_ref[:, 0:n - sh] = hi
            rz_ref[:, n - sh:n] = lo
            rolled = rz_ref[...]
            rz_ref[...] = jnp.where((rows & sh) != 0, rolled, old)

        diag = rz_ref[:, 0:1]                        # red[i, i]
        # A[i, w]  = best score of span (i, i+w)               (start-indexed chart)
        # bz       = end-indexed chart B kept in a rotated frame: at width w,
        #            bz[i, s] = B[(i+w) mod n, (s-w) mod n], so the combine needs no alignment.
        a_ref[...] = jnp.where(lane == 0, diag, 0.0)
        bz_ref[...] = jnp.where(lane == n - 1, diag, 0.0)

        def body(w, carry):
            # advance rz to frame w: column 0 becomes red[i, i + w]
            rz_rest = rz_ref[:, 1:n]
            rz_ref[:, 0:n - 1] = rz_rest
            # advance bz to frame w: bz_new[i, s] = bz_old[i + 1, (s - 1) mod n]
            bz_main = bz_ref[1:n, 0:n - 1]
            bz_wrap = bz_ref[1:n, n - 1:n]
            bz_ref[0:n - 1, 1:n] = bz_main
            bz_ref[0:n - 1, 0:1] = bz_wrap           # carries last width's column to lane 0
            # uniform full-width masked combine: one VPU add + one cross-lane max
            av = a_ref[...]
            bv = bz_ref[...]
            comb = jnp.max(jnp.where(lane < w, av + bv, _NEG), axis=1, keepdims=True)
            new = comb + rz_ref[:, 0:1]              # (N, 1) chart values for width w
            # lane-dense full-width select stores (no masked single-lane vst at offset w)
            a_ref[...] = jnp.where(lane == w, new, av)
            bz_ref[...] = jnp.where(lane == n - 1, new, bv)
            return carry

        lax.fori_loop(1, n, body, 0)

        # pred_score = chart[0, length - 1]
        # TODO(synk): fully-padded rows (length == 0) yield pred_score = 0 here; torch_struct's
        # behavior for length 0 is ill-defined, so that edge case is left as-is.
        row0 = a_ref[0:1, :]
        sel = jax.lax.broadcasted_iota(jnp.int32, (1, n), 1) == (length - 1)
        pred = jnp.sum(jnp.where(sel, row0, 0.0), axis=1, keepdims=True)       # (1, 1)

        gdiff = gold_ref[...] - base_ref[...]        # (logits - base) at the gold label, per span
        gold_score = jnp.sum(jnp.sum(gdiff, axis=1, keepdims=True), axis=0, keepdims=True)

        loss = jnp.maximum(pred - gold_score, 0.0)   # (1, 1)
        out_ref[...] = loss + jnp.zeros((8, 128), jnp.float32)


def _pick_class_block(num_classes):
    for cand in (64, 32, 16, 8):
        if num_classes % cand == 0 and num_classes > cand:
            return cand
    return num_classes


def span_classification_margin_loss(logits, labels, *,
                                    force_root_constituent=True,
                                    reduction="mean",
                                    class_block=None):
    if reduction not in ("none", "mean", "sum"):
        raise ValueError(f"Invalid value for reduction: {reduction}")
    B, N, N2, C = logits.shape
    assert N == N2 and labels.shape == (B, N, N)

    if class_block is None:
        class_block = _pick_class_block(C)
    assert C % class_block == 0
    num_chunks = C // class_block

    labels = labels.astype(jnp.int32)
    # (B, N, N, C) -> (B, C, N, N): take the class axis off the lane dimension (layout plumbing
    # only); logits are NOT cast here -- the kernel widens each block in VMEM.
    logits_cnn = jnp.transpose(logits, (0, 3, 1, 2))
    lengths = jnp.sum((labels[:, 0, :] != -100).astype(jnp.int32), axis=-1)    # (B,) int32

    kernel = functools.partial(
        _span_margin_kernel, n=N, class_block=class_block,
        force_root_constituent=force_root_constituent)

    # generous scoped-VMEM sizing (>= platform defaults): 2x-buffered blocks + scratch charts
    est = (2 * class_block * N * N * logits.dtype.itemsize
           + 2 * N * N * 4 + 2 * 8 * 128 * 4 + 6 * N * N * 4)
    vmem_limit = max(32 * 1024 * 1024, 2 * est)

    out = pl.pallas_call(
        kernel,
        out_shape=jax.ShapeDtypeStruct((B, 8, 128), jnp.float32),
        grid_spec=pltpu.PrefetchScalarGridSpec(
            num_scalar_prefetch=1,
            grid=(B, num_chunks),
            in_specs=[
                pl.BlockSpec((None, class_block, N, N), lambda b, c, lens: (b, c, 0, 0)),
                pl.BlockSpec((None, N, N), lambda b, c, lens: (b, 0, 0)),
            ],
            out_specs=pl.BlockSpec((None, 8, 128), lambda b, c, lens: (b, 0, 0)),
            scratch_shapes=[
                pltpu.VMEM((N, N), jnp.float32),   # m:    running max over classes
                pltpu.VMEM((N, N), jnp.float32),   # base: logits[..., 0]
                pltpu.VMEM((N, N), jnp.float32),   # gold: running gold-logit sum per span
                pltpu.VMEM((N, N), jnp.float32),   # A chart (start-indexed, width in lanes)
                pltpu.VMEM((N, N), jnp.float32),   # B chart (end-indexed, rotated frame)
                pltpu.VMEM((N, N), jnp.float32),   # sheared potentials (rotated frame)
            ],
        ),
        compiler_params=pltpu.CompilerParams(
            dimension_semantics=("parallel", "arbitrary"),
            vmem_limit_bytes=vmem_limit),
    )(lengths, logits_cnn, labels)

    losses = out[:, 0, 0]
    if reduction == "none":
        return losses
    elif reduction == "mean":
        return jnp.mean(losses)
    else:
        return jnp.sum(losses)


def _reference_loss(logits, labels, force_root_constituent=True, reduction="mean"):
    """Pure numpy re-implementation (max-semiring CKY) for verification."""
    logits = np.asarray(logits, dtype=np.float64)
    labels = np.asarray(labels)
    B, N, _, C = logits.shape
    gold = np.maximum(labels, 0)
    gold_event = np.eye(C)[gold]
    lg = logits - logits[..., :1]
    lengths = (labels[:, 0, :] != -100).sum(-1)
    augment = 1.0 - gold_event
    if force_root_constituent:
        augment[np.arange(B), 0, lengths - 1, 0] -= 1e9
    red = (lg + augment).max(-1)
    losses = np.zeros(B)
    for b in range(B):
        chart = np.zeros((N, N))
        for i in range(N):
            chart[i, i] = red[b, i, i]
        for w in range(1, N):
            for i in range(N - w):
                j = i + w
                best = max(chart[i, i + k] + chart[i + k + 1, j] for k in range(w))
                chart[i, j] = best + red[b, i, j]
        pred = chart[0, lengths[b] - 1]
        gold_score = (lg[b] * gold_event[b]).sum()
        losses[b] = max(pred - gold_score, 0.0)
    if reduction == "none":
        return losses
    elif reduction == "mean":
        return losses.mean()
    else:
        return losses.sum()


if __name__ == "__main__":
    B, N, C = 2, 16, 16   # batch, span-chart size, number of label classes
    key = jax.random.PRNGKey(0)
    logits = jax.random.normal(key, (B, N, N, C), dtype=jnp.float32)

    # Deterministic synthetic label chart: -100 marks padding / invalid entries.
    lengths = np.array([16, 12], dtype=np.int32)
    rng = np.random.RandomState(0)
    labels_np = np.full((B, N, N), -100, dtype=np.int32)
    for b in range(B):
        L = int(lengths[b])
        for i in range(L):
            for j in range(i, L):
                labels_np[b, i, j] = rng.randint(0, C)
        labels_np[b, 0, L - 1] = rng.randint(1, C)   # labeled root span
    labels = jnp.asarray(labels_np)

    # class_block=8 -> two class chunks, exercising the C-tiled accumulation path.
    loss = span_classification_margin_loss(logits, labels,
                                           force_root_constituent=True,
                                           reduction="mean",
                                           class_block=8)
    loss = jax.block_until_ready(loss)

    ref = _reference_loss(np.asarray(logits), labels_np,
                          force_root_constituent=True, reduction="mean")
    np.testing.assert_allclose(float(loss), float(ref), rtol=1e-4, atol=1e-3)
    print("KERNEL_OK")
</pallas_src>

<mosaic_0001>
module attributes {stable_mosaic.version = 11 : i64} {
  func.func @_span_margin_kernel(%arg0: i32, %arg1: i32, %arg2: memref<2xi32, #tpu.memory_space<smem>>, %arg3: memref<1x8x16x16xf32, #tpu.memory_space<vmem>>, %arg4: memref<1x16x16xi32, #tpu.memory_space<vmem>>, %arg5: memref<1x8x128xf32, #tpu.memory_space<vmem>>, %arg6: memref<16x16xf32, #tpu.memory_space<vmem>>, %arg7: memref<16x16xf32, #tpu.memory_space<vmem>>, %arg8: memref<16x16xf32, #tpu.memory_space<vmem>>, %arg9: memref<16x16xf32, #tpu.memory_space<vmem>>, %arg10: memref<16x16xf32, #tpu.memory_space<vmem>>, %arg11: memref<16x16xf32, #tpu.memory_space<vmem>>) attributes {dimension_semantics = [#tpu.dimension_semantics<parallel>, #tpu.dimension_semantics<arbitrary>], iteration_bounds = array<i64: 2, 2>, scalar_prefetch = 1 : i64, scratch_operands = 6 : i64, tpu.core_type = #tpu.core_type<tc>, window_params = [{transform_indices = @transform_0, window_bounds = array<i64: 1, 8, 16, 16>}, {transform_indices = @transform_1, window_bounds = array<i64: 1, 16, 16>}, {transform_indices = @transform_2, window_bounds = array<i64: 1, 8, 128>}]} {
    %0 = arith.index_cast %arg0 : i32 to index
    %1 = memref.load %arg2[%0] : memref<2xi32, #tpu.memory_space<smem>>
    %c0 = arith.constant 0 : index
    %c0_0 = arith.constant 0 : index
    %c0_1 = arith.constant 0 : index
    %c0_2 = arith.constant 0 : index
    %2 = vector.load %arg3[%c0, %c0_0, %c0_1, %c0_2] : memref<1x8x16x16xf32, #tpu.memory_space<vmem>>, vector<1x8x16x16xf32>
    %3 = vector.shape_cast %2 : vector<1x8x16x16xf32> to vector<8x16x16xf32>
    %c0_3 = arith.constant 0 : index
    %c0_4 = arith.constant 0 : index
    %c0_5 = arith.constant 0 : index
    %4 = vector.load %arg4[%c0_3, %c0_4, %c0_5] : memref<1x16x16xi32, #tpu.memory_space<vmem>>, vector<1x16x16xi32>
    %5 = vector.shape_cast %4 : vector<1x16x16xi32> to vector<16x16xi32>
    %c0_i32 = arith.constant 0 : i32
    %6 = vector.broadcast %c0_i32 : i32 to vector<16x16xi32>
    %7 = arith.maxsi %5, %6 : vector<16x16xi32>
    %c0_i32_6 = arith.constant 0 : i32
    %8 = arith.cmpi eq, %arg1, %c0_i32_6 : i32
    %9 = arith.extui %8 : i1 to i32
    %c0_i32_7 = arith.constant 0 : i32
    %10 = arith.cmpi ne, %9, %c0_i32_7 : i32
    scf.if %10 {
      %50 = vector.extract_strided_slice %3 {offsets = [0, 0, 0], sizes = [1, 16, 16], strides = [1, 1, 1]} : vector<8x16x16xf32> to vector<1x16x16xf32>
      %51 = vector.shape_cast %50 : vector<1x16x16xf32> to vector<16x16xf32>
      %c0_26 = arith.constant 0 : index
      %c0_27 = arith.constant 0 : index
      %52 = vector.load %arg7[%c0_26, %c0_27] : memref<16x16xf32, #tpu.memory_space<vmem>>, vector<16x16xf32>
      tpu.vector_store %arg7[%c0_26, %c0_27], %51 {strides = array<i32>} : memref<16x16xf32, #tpu.memory_space<vmem>>, vector<16x16xf32>,
      %cst_28 = arith.constant -1.000000e+30 : f32
      %53 = vector.broadcast %cst_28 : f32 to vector<16x16xf32>
      %c0_29 = arith.constant 0 : index
      %c0_30 = arith.constant 0 : index
      %54 = vector.load %arg6[%c0_29, %c0_30] : memref<16x16xf32, #tpu.memory_space<vmem>>, vector<16x16xf32>
      tpu.vector_store %arg6[%c0_29, %c0_30], %53 {strides = array<i32>} : memref<16x16xf32, #tpu.memory_space<vmem>>, vector<16x16xf32>,
      %cst_31 = arith.constant 0.000000e+00 : f32
      %55 = vector.broadcast %cst_31 : f32 to vector<16x16xf32>
      %c0_32 = arith.constant 0 : index
      %c0_33 = arith.constant 0 : index
      %56 = vector.load %arg8[%c0_32, %c0_33] : memref<16x16xf32, #tpu.memory_space<vmem>>, vector<16x16xf32>
      tpu.vector_store %arg8[%c0_32, %c0_33], %55 {strides = array<i32>} : memref<16x16xf32, #tpu.memory_space<vmem>>, vector<16x16xf32>,
    } else {
    }
    %11 = tpu.iota {dimensions = array<i32: 0>} : vector<8x16x16xi32>
    %c8_i32 = arith.constant 8 : i32
    %12 = arith.muli %arg1, %c8_i32 : i32
    %13 = vector.broadcast %12 : i32 to vector<8x16x16xi32>
    %14 = arith.addi %11, %13 : vector<8x16x16xi32>
    %15 = vector.shape_cast %7 : vector<16x16xi32> to vector<1x16x16xi32>
    %16 = vector.broadcast %15 : vector<1x16x16xi32> to vector<8x16x16xi32>
    %17 = arith.cmpi eq, %14, %16 : vector<8x16x16xi32>
    %cst = arith.constant 0.000000e+00 : f32
    %cst_8 = arith.constant 1.000000e+00 : f32
    %18 = vector.broadcast %cst : f32 to vector<8x16x16xf32>
    %19 = vector.broadcast %cst_8 : f32 to vector<8x16x16xf32>
    %20 = arith.select %17, %18, %19 : vector<8x16x16xi1>, vector<8x16x16xf32>
    %21 = tpu.iota {dimensions = array<i32: 1>} : vector<8x16x16xi32>
    %22 = tpu.iota {dimensions = array<i32: 2>} : vector<8x16x16xi32>
    %c0_i32_9 = arith.constant 0 : i32
    %23 = vector.broadcast %c0_i32_9 : i32 to vector<8x16x16xi32>
    %24 = arith.cmpi eq, %21, %23 : vector<8x16x16xi32>
    %c1_i32 = arith.constant 1 : i32
    %25 = arith.subi %1, %c1_i32 : i32
    %26 = vector.broadcast %25 : i32 to vector<8x16x16xi32>
    %27 = arith.cmpi eq, %22, %26 : vector<8x16x16xi32>
    %28 = arith.andi %24, %27 : vector<8x16x16xi1>
    %c0_i32_10 = arith.constant 0 : i32
    %29 = vector.broadcast %c0_i32_10 : i32 to vector<8x16x16xi32>
    %30 = arith.cmpi eq, %14, %29 : vector<8x16x16xi32>
    %31 = arith.andi %28, %30 : vector<8x16x16xi1>
    %cst_11 = arith.constant 1.000000e+09 : f32
    %cst_12 = arith.constant 0.000000e+00 : f32
    %32 = vector.broadcast %cst_11 : f32 to vector<8x16x16xf32>
    %33 = vector.broadcast %cst_12 : f32 to vector<8x16x16xf32>
    %34 = arith.select %31, %32, %33 : vector<8x16x16xi1>, vector<8x16x16xf32>
    %35 = arith.subf %20, %34 : vector<8x16x16xf32>
    %c0_13 = arith.constant 0 : index
    %c0_14 = arith.constant 0 : index
    %36 = vector.load %arg6[%c0_13, %c0_14] : memref<16x16xf32, #tpu.memory_space<vmem>>, vector<16x16xf32>
    %37 = arith.addf %3, %35 : vector<8x16x16xf32>
    %cst_15 = arith.constant dense<0xFF800000> : vector<16x16xf32>
    %38 = vector.multi_reduction <maximumf>, %37, %cst_15 [0] : vector<8x16x16xf32> to vector<16x16xf32>
    %39 = arith.maximumf %36, %38 : vector<16x16xf32>
    %c0_16 = arith.constant 0 : index
    %c0_17 = arith.constant 0 : index
    %40 = vector.load %arg6[%c0_16, %c0_17] : memref<16x16xf32, #tpu.memory_space<vmem>>, vector<16x16xf32>
    tpu.vector_store %arg6[%c0_16, %c0_17], %39 {strides = array<i32>} : memref<16x16xf32, #tpu.memory_space<vmem>>, vector<16x16xf32>,
    %c0_18 = arith.constant 0 : index
    %c0_19 = arith.constant 0 : index
    %41 = vector.load %arg8[%c0_18, %c0_19] : memref<16x16xf32, #tpu.memory_space<vmem>>, vector<16x16xf32>
    %cst_20 = arith.constant 0.000000e+00 : f32
    %42 = vector.broadcast %cst_20 : f32 to vector<8x16x16xf32>
    %43 = arith.select %17, %3, %42 : vector<8x16x16xi1>, vector<8x16x16xf32>
    %cst_21 = arith.constant dense<0.000000e+00> : vector<16x16xf32>
    %44 = vector.multi_reduction <add>, %43, %cst_21 [0] : vector<8x16x16xf32> to vector<16x16xf32>
    %45 = arith.addf %41, %44 : vector<16x16xf32>
    %c0_22 = arith.constant 0 : index
    %c0_23 = arith.constant 0 : index
    %46 = vector.load %arg8[%c0_22, %c0_23] : memref<16x16xf32, #tpu.memory_space<vmem>>, vector<16x16xf32>
    tpu.vector_store %arg8[%c0_22, %c0_23], %45 {strides = array<i32>} : memref<16x16xf32, #tpu.memory_space<vmem>>, vector<16x16xf32>,
    %c1_i32_24 = arith.constant 1 : i32
    %47 = arith.cmpi eq, %arg1, %c1_i32_24 : i32
    %48 = arith.extui %47 : i1 to i32
    %c0_i32_25 = arith.constant 0 : i32
    %49 = arith.cmpi ne, %48, %c0_i32_25 : i32
    scf.if %49 {
      %50 = tpu.iota {dimensions = array<i32: 1>} : vector<16x16xi32>
      %51 = tpu.iota {dimensions = array<i32: 0>} : vector<16x16xi32>
      %c0_26 = arith.constant 0 : index
      %c0_27 = arith.constant 0 : index
      %52 = vector.load %arg6[%c0_26, %c0_27] : memref<16x16xf32, #tpu.memory_space<vmem>>, vector<16x16xf32>
      %c0_28 = arith.constant 0 : index
      %c0_29 = arith.constant 0 : index
      %53 = vector.load %arg7[%c0_28, %c0_29] : memref<16x16xf32, #tpu.memory_space<vmem>>, vector<16x16xf32>
      %54 = arith.subf %52, %53 : vector<16x16xf32>
      %c0_30 = arith.constant 0 : index
      %c0_31 = arith.constant 0 : index
      %55 = vector.load %arg11[%c0_30, %c0_31] : memref<16x16xf32, #tpu.memory_space<vmem>>, vector<16x16xf32>
      tpu.vector_store %arg11[%c0_30, %c0_31], %54 {strides = array<i32>} : memref<16x16xf32, #tpu.memory_space<vmem>>, vector<16x16xf32>,
      %c0_32 = arith.constant 0 : index
      %c0_33 = arith.constant 0 : index
      %56 = vector.load %arg11[%c0_32, %c0_33] : memref<16x16xf32, #tpu.memory_space<vmem>>, vector<16x16xf32>
      %c0_34 = arith.constant 0 : index
      %c0_35 = arith.constant 0 : index
      %57 = vector.load %arg11[%c0_34, %c0_35] : memref<16x16xf32, #tpu.memory_space<vmem>>, vector<16x1xf32>
      %c0_36 = arith.constant 0 : index
      %c1 = arith.constant 1 : index
      %58 = vector.load %arg11[%c0_36, %c1] : memref<16x16xf32, #tpu.memory_space<vmem>>, vector<16x15xf32>
      %c0_37 = arith.constant 0 : index
      %c0_38 = arith.constant 0 : index
      %59 = vector.load %arg11[%c0_37, %c0_38] : memref<16x16xf32, #tpu.memory_space<vmem>>, vector<16x15xf32>
      tpu.vector_store %arg11[%c0_37, %c0_38], %58 {strides = array<i32>} : memref<16x16xf32, #tpu.memory_space<vmem>>, vector<16x15xf32>,
      %c0_39 = arith.constant 0 : index
      %c15 = arith.constant 15 : index
      %60 = vector.load %arg11[%c0_39, %c15] : memref<16x16xf32, #tpu.memory_space<vmem>>, vector<16x1xf32>
      tpu.vector_store %arg11[%c0_39, %c15], %57 {strides = array<i32>} : memref<16x16xf32, #tpu.memory_space<vmem>>, vector<16x1xf32>,
      %c0_40 = arith.constant 0 : index
      %c0_41 = arith.constant 0 : index
      %61 = vector.load %arg11[%c0_40, %c0_41] : memref<16x16xf32, #tpu.memory_space<vmem>>, vector<16x16xf32>
      %c1_i32_42 = arith.constant 1 : i32
      %62 = vector.broadcast %c1_i32_42 : i32 to vector<16x16xi32>
      %63 = arith.andi %51, %62 : vector<16x16xi32>
      %c0_i32_43 = arith.constant 0 : i32
      %64 = vector.broadcast %c0_i32_43 : i32 to vector<16x16xi32>
      %65 = arith.cmpi ne, %63, %64 : vector<16x16xi32>
      %66 = arith.select %65, %61, %56 : vector<16x16xi1>, vector<16x16xf32>
      %c0_44 = arith.constant 0 : index
      %c0_45 = arith.constant 0 : index
      %67 = vector.load %arg11[%c0_44, %c0_45] : memref<16x16xf32, #tpu.memory_space<vmem>>, vector<16x16xf32>
      tpu.vector_store %arg11[%c0_44, %c0_45], %66 {strides = array<i32>} : memref<16x16xf32, #tpu.memory_space<vmem>>, vector<16x16xf32>,
      %c0_46 = arith.constant 0 : index
      %c0_47 = arith.constant 0 : index
      %68 = vector.load %arg11[%c0_46, %c0_47] : memref<16x16xf32, #tpu.memory_space<vmem>>, vector<16x16xf32>
      %c0_48 = arith.constant 0 : index
      %c0_49 = arith.constant 0 : index
      %69 = vector.load %arg11[%c0_48, %c0_49] : memref<16x16xf32, #tpu.memory_space<vmem>>, vector<16x2xf32>
      %c0_50 = arith.constant 0 : index
      %c2 = arith.constant 2 : index
      %70 = vector.load %arg11[%c0_50, %c2] : memref<16x16xf32, #tpu.memory_space<vmem>>, vector<16x14xf32>
      %c0_51 = arith.constant 0 : index
      %c0_52 = arith.constant 0 : index
      %71 = vector.load %arg11[%c0_51, %c0_52] : memref<16x16xf32, #tpu.memory_space<vmem>>, vector<16x14xf32>
      tpu.vector_store %arg11[%c0_51, %c0_52], %70 {strides = array<i32>} : memref<16x16xf32, #tpu.memory_space<vmem>>, vector<16x14xf32>,
      %c0_53 = arith.constant 0 : index
      %c14 = arith.constant 14 : index
      %72 = vector.load %arg11[%c0_53, %c14] : memref<16x16xf32, #tpu.memory_space<vmem>>, vector<16x2xf32>
      tpu.vector_store %arg11[%c0_53, %c14], %69 {strides = array<i32>} : memref<16x16xf32, #tpu.memory_space<vmem>>, vector<16x2xf32>,
      %c0_54 = arith.constant 0 : index
      %c0_55 = arith.constant 0 : index
      %73 = vector.load %arg11[%c0_54, %c0_55] : memref<16x16xf32, #tpu.memory_space<vmem>>, vector<16x16xf32>
      %c2_i32 = arith.constant 2 : i32
      %74 = vector.broadcast %c2_i32 : i32 to vector<16x16xi32>
      %75 = arith.andi %51, %74 : vector<16x16xi32>
      %c0_i32_56 = arith.constant 0 : i32
      %76 = vector.broadcast %c0_i32_56 : i32 to vector<16x16xi32>
      %77 = arith.cmpi ne, %75, %76 : vector<16x16xi32>
      %78 = arith.select %77, %73, %68 : vector<16x16xi1>, vector<16x16xf32>
      %c0_57 = arith.constant 0 : index
      %c0_58 = arith.constant 0 : index
      %79 = vector.load %arg11[%c0_57, %c0_58] : memref<16x16xf32, #tpu.memory_space<vmem>>, vector<16x16xf32>
      tpu.vector_store %arg11[%c0_57, %c0_58], %78 {strides = array<i32>} : memref<16x16xf32, #tpu.memory_space<vmem>>, vector<16x16xf32>,
      %c0_59 = arith.constant 0 : index
      %c0_60 = arith.constant 0 : index
      %80 = vector.load %arg11[%c0_59, %c0_60] : memref<16x16xf32, #tpu.memory_space<vmem>>, vector<16x16xf32>
      %c0_61 = arith.constant 0 : index
      %c0_62 = arith.constant 0 : index
      %81 = vector.load %arg11[%c0_61, %c0_62] : memref<16x16xf32, #tpu.memory_space<vmem>>, vector<16x4xf32>
      %c0_63 = arith.constant 0 : index
      %c4 = arith.constant 4 : index
      %82 = vector.load %arg11[%c0_63, %c4] : memref<16x16xf32, #tpu.memory_space<vmem>>, vector<16x12xf32>
      %c0_64 = arith.constant 0 : index
      %c0_65 = arith.constant 0 : index
      %83 = vector.load %arg11[%c0_64, %c0_65] : memref<16x16xf32, #tpu.memory_space<vmem>>, vector<16x12xf32>
      tpu.vector_store %arg11[%c0_64, %c0_65], %82 {strides = array<i32>} : memref<16x16xf32, #tpu.memory_space<vmem>>, vector<16x12xf32>,
      %c0_66 = arith.constant 0 : index
      %c12 = arith.constant 12 : index
      %84 = vector.load %arg11[%c0_66, %c12] : memref<16x16xf32, #tpu.memory_space<vmem>>, vector<16x4xf32>
      tpu.vector_store %arg11[%c0_66, %c12], %81 {strides = array<i32>} : memref<16x16xf32, #tpu.memory_space<vmem>>, vector<16x4xf32>,
      %c0_67 = arith.constant 0 : index
      %c0_68 = arith.constant 0 : index
      %85 = vector.load %arg11[%c0_67, %c0_68] : memref<16x16xf32, #tpu.memory_space<vmem>>, vector<16x16xf32>
      %c4_i32 = arith.constant 4 : i32
      %86 = vector.broadcast %c4_i32 : i32 to vector<16x16xi32>
      %87 = arith.andi %51, %86 : vector<16x16xi32>
      %c0_i32_69 = arith.constant 0 : i32
      %88 = vector.broadcast %c0_i32_69 : i32 to vector<16x16xi32>
      %89 = arith.cmpi ne, %87, %88 : vector<16x16xi32>
      %90 = arith.select %89, %85, %80 : vector<16x16xi1>, vector<16x16xf32>
      %c0_70 = arith.constant 0 : index
      %c0_71 = arith.constant 0 : index
      %91 = vector.load %arg11[%c0_70, %c0_71] : memref<16x16xf32, #tpu.memory_space<vmem>>, vector<16x16xf32>
      tpu.vector_store %arg11[%c0_70, %c0_71], %90 {strides = array<i32>} : memref<16x16xf32, #tpu.memory_space<vmem>>, vector<16x16xf32>,
      %c0_72 = arith.constant 0 : index
      %c0_73 = arith.constant 0 : index
      %92 = vector.load %arg11[%c0_72, %c0_73] : memref<16x16xf32, #tpu.memory_space<vmem>>, vector<16x16xf32>
      %c0_74 = arith.constant 0 : index
      %c0_75 = arith.constant 0 : index
      %93 = vector.load %arg11[%c0_74, %c0_75] : memref<16x16xf32, #tpu.memory_space<vmem>>, vector<16x8xf32>
      %c0_76 = arith.constant 0 : index
      %c8 = arith.constant 8 : index
      %94 = vector.load %arg11[%c0_76, %c8] : memref<16x16xf32, #tpu.memory_space<vmem>>, vector<16x8xf32>
      %c0_77 = arith.constant 0 : index
      %c0_78 = arith.constant 0 : index
      %95 = vector.load %arg11[%c0_77, %c0_78] : memref<16x16xf32, #tpu.memory_space<vmem>>, vector<16x8xf32>
      tpu.vector_store %arg11[%c0_77, %c0_78], %94 {strides = array<i32>} : memref<16x16xf32, #tpu.memory_space<vmem>>, vector<16x8xf32>,
      %c0_79 = arith.constant 0 : index
      %c8_80 = arith.constant 8 : index
      %96 = vector.load %arg11[%c0_79, %c8_80] : memref<16x16xf32, #tpu.memory_space<vmem>>, vector<16x8xf32>
      tpu.vector_store %arg11[%c0_79, %c8_80], %93 {strides = array<i32>} : memref<16x16xf32, #tpu.memory_space<vmem>>, vector<16x8xf32>,
      %c0_81 = arith.constant 0 : index
      %c0_82 = arith.constant 0 : index
      %97 = vector.load %arg11[%c0_81, %c0_82] : memref<16x16xf32, #tpu.memory_space<vmem>>, vector<16x16xf32>
      %c8_i32_83 = arith.constant 8 : i32
      %98 = vector.broadcast %c8_i32_83 : i32 to vector<16x16xi32>
      %99 = arith.andi %51, %98 : vector<16x16xi32>
      %c0_i32_84 = arith.constant 0 : i32
      %100 = vector.broadcast %c0_i32_84 : i32 to vector<16x16xi32>
      %101 = arith.cmpi ne, %99, %100 : vector<16x16xi32>
      %102 = arith.select %101, %97, %92 : vector<16x16xi1>, vector<16x16xf32>
      %c0_85 = arith.constant 0 : index
      %c0_86 = arith.constant 0 : index
      %103 = vector.load %arg11[%c0_85, %c0_86] : memref<16x16xf32, #tpu.memory_space<vmem>>, vector<16x16xf32>
      tpu.vector_store %arg11[%c0_85, %c0_86], %102 {strides = array<i32>} : memref<16x16xf32, #tpu.memory_space<vmem>>, vector<16x16xf32>,
      %c0_87 = arith.constant 0 : index
      %c0_88 = arith.constant 0 : index
      %104 = vector.load %arg11[%c0_87, %c0_88] : memref<16x16xf32, #tpu.memory_space<vmem>>, vector<16x1xf32>
      %c0_i32_89 = arith.constant 0 : i32
      %105 = vector.broadcast %c0_i32_89 : i32 to vector<16x16xi32>
      %106 = arith.cmpi eq, %50, %105 : vector<16x16xi32>
      %cst_90 = arith.constant 0.000000e+00 : f32
      %107 = vector.shape_cast %104 : vector<16x1xf32> to vector<16x1xf32>
      %108 = vector.broadcast %107 : vector<16x1xf32> to vector<16x16xf32>
      %109 = vector.broadcast %cst_90 : f32 to vector<16x16xf32>
      %110 = arith.select %106, %108, %109 : vector<16x16xi1>, vector<16x16xf32>
      %c0_91 = arith.constant 0 : index
      %c0_92 = arith.constant 0 : index
      %111 = vector.load %arg9[%c0_91, %c0_92] : memref<16x16xf32, #tpu.memory_space<vmem>>, vector<16x16xf32>
      tpu.vector_store %arg9[%c0_91, %c0_92], %110 {strides = array<i32>} : memref<16x16xf32, #tpu.memory_space<vmem>>, vector<16x16xf32>,
      %c15_i32 = arith.constant 15 : i32
      %112 = vector.broadcast %c15_i32 : i32 to vector<16x16xi32>
      %113 = arith.cmpi eq, %50, %112 : vector<16x16xi32>
      %cst_93 = arith.constant 0.000000e+00 : f32
      %114 = vector.shape_cast %104 : vector<16x1xf32> to vector<16x1xf32>
      %115 = vector.broadcast %114 : vector<16x1xf32> to vector<16x16xf32>
      %116 = vector.broadcast %cst_93 : f32 to vector<16x16xf32>
      %117 = arith.select %113, %115, %116 : vector<16x16xi1>, vector<16x16xf32>
      %c0_94 = arith.constant 0 : index
      %c0_95 = arith.constant 0 : index
      %118 = vector.load %arg10[%c0_94, %c0_95] : memref<16x16xf32, #tpu.memory_space<vmem>>, vector<16x16xf32>
      tpu.vector_store %arg10[%c0_94, %c0_95], %117 {strides = array<i32>} : memref<16x16xf32, #tpu.memory_space<vmem>>, vector<16x16xf32>,
      %c1_i32_96 = arith.constant 1 : i32
      %c15_i32_97 = arith.constant 15 : i32
      %119 = arith.addi %c1_i32_96, %c15_i32_97 : i32
      %c1_i32_98 = arith.constant 1 : i32
      scf.for %arg12 = %c1_i32_96 to %119 step %c1_i32_98  : i32 {
        %c0_116 = arith.constant 0 : index
        %c1_117 = arith.constant 1 : index
        %145 = vector.load %arg11[%c0_116, %c1_117] : memref<16x16xf32, #tpu.memory_space<vmem>>, vector<16x15xf32>
        %c0_118 = arith.constant 0 : index
        %c0_119 = arith.constant 0 : index
        %146 = vector.load %arg11[%c0_118, %c0_119] : memref<16x16xf32, #tpu.memory_space<vmem>>, vector<16x15xf32>
        tpu.vector_store %arg11[%c0_118, %c0_119], %145 {strides = array<i32>} : memref<16x16xf32, #tpu.memory_space<vmem>>, vector<16x15xf32>,
        %c1_120 = arith.constant 1 : index
        %c0_121 = arith.constant 0 : index
        %147 = vector.load %arg10[%c1_120, %c0_121] : memref<16x16xf32, #tpu.memory_space<vmem>>, vector<15x15xf32>
        %c1_122 = arith.constant 1 : index
        %c15_123 = arith.constant 15 : index
        %148 = vector.load %arg10[%c1_122, %c15_123] : memref<16x16xf32, #tpu.memory_space<vmem>>, vector<15x1xf32>
        %c0_124 = arith.constant 0 : index
        %c1_125 = arith.constant 1 : index
        %149 = vector.load %arg10[%c0_124, %c1_125] : memref<16x16xf32, #tpu.memory_space<vmem>>, vector<15x15xf32>
        tpu.vector_store %arg10[%c0_124, %c1_125], %147 {strides = array<i32>} : memref<16x16xf32, #tpu.memory_space<vmem>>, vector<15x15xf32>,
        %c0_126 = arith.constant 0 : index
        %c0_127 = arith.constant 0 : index
        %150 = vector.load %arg10[%c0_126, %c0_127] : memref<16x16xf32, #tpu.memory_space<vmem>>, vector<15x1xf32>
        tpu.vector_store %arg10[%c0_126, %c0_127], %148 {strides = array<i32>} : memref<16x16xf32, #tpu.memory_space<vmem>>, vector<15x1xf32>,
        %c0_128 = arith.constant 0 : index
        %c0_129 = arith.constant 0 : index
        %151 = vector.load %arg9[%c0_128, %c0_129] : memref<16x16xf32, #tpu.memory_space<vmem>>, vector<16x16xf32>
        %c0_130 = arith.constant 0 : index
        %c0_131 = arith.constant 0 : index
        %152 = vector.load %arg10[%c0_130, %c0_131] : memref<16x16xf32, #tpu.memory_space<vmem>>, vector<16x16xf32>
        %153 = vector.broadcast %arg12 : i32 to vector<16x16xi32>
        %154 = arith.cmpi slt, %50, %153 : vector<16x16xi32>
        %155 = arith.addf %151, %152 : vector<16x16xf32>
        %cst_132 = arith.constant -1.000000e+30 : f32
        %156 = vector.broadcast %cst_132 : f32 to vector<16x16xf32>
        %157 = arith.select %154, %155, %156 : vector<16x16xi1>, vector<16x16xf32>
        %cst_133 = arith.constant dense<0xFF800000> : vector<16xf32>
        %158 = vector.multi_reduction <maximumf>, %157, %cst_133 [1] : vector<16x16xf32> to vector<16xf32>
        %159 = vector.shape_cast %158 : vector<16xf32> to vector<16x1xf32>
        %c0_134 = arith.constant 0 : index
        %c0_135 = arith.constant 0 : index
        %160 = vector.load %arg11[%c0_134, %c0_135] : memref<16x16xf32, #tpu.memory_space<vmem>>, vector<16x1xf32>
        %161 = arith.addf %159, %160 : vector<16x1xf32>
        %162 = vector.broadcast %arg12 : i32 to vector<16x16xi32>
        %163 = arith.cmpi eq, %50, %162 : vector<16x16xi32>
        %164 = vector.shape_cast %161 : vector<16x1xf32> to vector<16x1xf32>
        %165 = vector.broadcast %164 : vector<16x1xf32> to vector<16x16xf32>
        %166 = arith.select %163, %165, %151 : vector<16x16xi1>, vector<16x16xf32>
        %c0_136 = arith.constant 0 : index
        %c0_137 = arith.constant 0 : index
        %167 = vector.load %arg9[%c0_136, %c0_137] : memref<16x16xf32, #tpu.memory_space<vmem>>, vector<16x16xf32>
        tpu.vector_store %arg9[%c0_136, %c0_137], %166 {strides = array<i32>} : memref<16x16xf32, #tpu.memory_space<vmem>>, vector<16x16xf32>,
        %c15_i32_138 = arith.constant 15 : i32
        %168 = vector.broadcast %c15_i32_138 : i32 to vector<16x16xi32>
        %169 = arith.cmpi eq, %50, %168 : vector<16x16xi32>
        %170 = vector.shape_cast %161 : vector<16x1xf32> to vector<16x1xf32>
        %171 = vector.broadcast %170 : vector<16x1xf32> to vector<16x16xf32>
        %172 = arith.select %169, %171, %152 : vector<16x16xi1>, vector<16x16xf32>
        %c0_139 = arith.constant 0 : index
        %c0_140 = arith.constant 0 : index
        %173 = vector.load %arg10[%c0_139, %c0_140] : memref<16x16xf32, #tpu.memory_space<vmem>>, vector<16x16xf32>
        tpu.vector_store %arg10[%c0_139, %c0_140], %172 {strides = array<i32>} : memref<16x16xf32, #tpu.memory_space<vmem>>, vector<16x16xf32>,
      }
      %c15_i32_99 = arith.constant 15 : i32
      %c0_100 = arith.constant 0 : index
      %c0_101 = arith.constant 0 : index
      %120 = vector.load %arg9[%c0_100, %c0_101] : memref<16x16xf32, #tpu.memory_space<vmem>>, vector<1x16xf32>
      %121 = tpu.iota {dimensions = array<i32: 1>} : vector<1x16xi32>
      %c1_i32_102 = arith.constant 1 : i32
      %122 = arith.subi %1, %c1_i32_102 : i32
      %123 = vector.broadcast %122 : i32 to vector<1x16xi32>
      %124 = arith.cmpi eq, %121, %123 : vector<1x16xi32>
      %cst_103 = arith.constant 0.000000e+00 : f32
      %125 = vector.broadcast %cst_103 : f32 to vector<1x16xf32>
      %126 = arith.select %124, %120, %125 : vector<1x16xi1>, vector<1x16xf32>
      %cst_104 = arith.constant dense<0.000000e+00> : vector<1xf32>
      %127 = vector.multi_reduction <add>, %126, %cst_104 [1] : vector<1x16xf32> to vector<1xf32>
      %128 = vector.shape_cast %127 : vector<1xf32> to vector<1x1xf32>
      %c0_105 = arith.constant 0 : index
      %c0_106 = arith.constant 0 : index
      %129 = vector.load %arg8[%c0_105, %c0_106] : memref<16x16xf32, #tpu.memory_space<vmem>>, vector<16x16xf32>
      %c0_107 = arith.constant 0 : index
      %c0_108 = arith.constant 0 : index
      %130 = vector.load %arg7[%c0_107, %c0_108] : memref<16x16xf32, #tpu.memory_space<vmem>>, vector<16x16xf32>
      %131 = arith.subf %129, %130 : vector<16x16xf32>
      %cst_109 = arith.constant dense<0.000000e+00> : vector<16xf32>
      %132 = vector.multi_reduction <add>, %131, %cst_109 [1] : vector<16x16xf32> to vector<16xf32>
      %133 = vector.shape_cast %132 : vector<16xf32> to vector<16x1xf32>
      %cst_110 = arith.constant dense<0.000000e+00> : vector<1xf32>
      %134 = vector.multi_reduction <add>, %133, %cst_110 [0] : vector<16x1xf32> to vector<1xf32>
      %135 = vector.shape_cast %134 : vector<1xf32> to vector<1x1xf32>
      %136 = arith.subf %128, %135 : vector<1x1xf32>
      %cst_111 = arith.constant 0.000000e+00 : f32
      %137 = vector.broadcast %cst_111 : f32 to vector<1x1xf32>
      %138 = arith.maximumf %136, %137 : vector<1x1xf32>
      %cst_112 = arith.constant 0.000000e+00 : f32
      %139 = vector.broadcast %cst_112 : f32 to vector<8x128xf32>
      %140 = vector.broadcast %138 : vector<1x1xf32> to vector<8x128xf32>
      %141 = arith.addf %140, %139 : vector<8x128xf32>
      %c0_113 = arith.constant 0 : index
      %c0_114 = arith.constant 0 : index
      %c0_115 = arith.constant 0 : index
      %142 = vector.load %arg5[%c0_113, %c0_114, %c0_115] : memref<1x8x128xf32, #tpu.memory_space<vmem>>, vector<1x8x128xf32>
      %143 = vector.shape_cast %142 : vector<1x8x128xf32> to vector<8x128xf32>
      %144 = vector.shape_cast %141 : vector<8x128xf32> to vector<1x8x128xf32>
      tpu.vector_store %arg5[%c0_113, %c0_114, %c0_115], %144 {strides = array<i32>} : memref<1x8x128xf32, #tpu.memory_space<vmem>>, vector<1x8x128xf32>,
    } else {
    }
    return
  }
  func.func @transform_0(%arg0: i32, %arg1: i32, %arg2: memref<2xi32, #tpu.memory_space<smem>>) -> (i32, i32, i32, i32) {
    %c0_i32 = arith.constant 0 : i32
    %c0_i32_0 = arith.constant 0 : i32
    %c0_i32_1 = arith.constant 0 : i32
    return %arg0, %arg1, %c0_i32, %c0_i32_0 : i32, i32, i32, i32
  }
  func.func @transform_1(%arg0: i32, %arg1: i32, %arg2: memref<2xi32, #tpu.memory_space<smem>>) -> (i32, i32, i32) {
    %c0_i32 = arith.constant 0 : i32
    %c0_i32_0 = arith.constant 0 : i32
    %c0_i32_1 = arith.constant 0 : i32
    return %arg0, %c0_i32, %c0_i32_0 : i32, i32, i32
  }
  func.func @transform_2(%arg0: i32, %arg1: i32, %arg2: memref<2xi32, #tpu.memory_space<smem>>) -> (i32, i32, i32) {
    %c0_i32 = arith.constant 0 : i32
    %c0_i32_0 = arith.constant 0 : i32
    %c0_i32_1 = arith.constant 0 : i32
    return %arg0, %c0_i32, %c0_i32_0 : i32, i32, i32
  }
}

</mosaic_0001>

<llo_original>
// kernel: tpu_custom_call.1
$region0: #{tpu_custom_call.1}
  #allocation0 [shape = 'u32[]', space=smem, size = 0x4, offset = 0x4, fixed_abs, tag = 'smem constant byte address 0x4 - core index']
  #allocation1 [shape = 'u32[144,128]{1,0:T(1,128)}', space=vmem, size = 0x12000, scoped, tag = 'internal scratch']
  #allocation2 [shape = 'f32[16,16]{1,0:T(8,128)}', space=vmem, size = 0x2000, scoped, tag = 'scratch operand']
  #allocation3 [shape = 'f32[16,16]{1,0:T(8,128)}', space=vmem, size = 0x2000, scoped, tag = 'scratch operand']
  #allocation4 [shape = 'f32[16,16]{1,0:T(8,128)}', space=vmem, size = 0x2000, scoped, tag = 'scratch operand']
  #allocation5 [shape = 'f32[16,16]{1,0:T(8,128)}', space=vmem, size = 0x2000, scoped, tag = 'scratch operand']
  #allocation6 [shape = 'f32[16,16]{1,0:T(8,128)}', space=vmem, size = 0x2000, scoped, tag = 'scratch operand']
  #allocation7 [shape = 'f32[16,16]{1,0:T(8,128)}', space=vmem, size = 0x2000, scoped, tag = 'scratch operand']
  #allocation8 [shape = 's32[1]{0}', space=sflag, size = 0x4, scoped, tag = 'scoped memory for tpu_custom_call.1']
  #allocation9 [shape = 'u8[512]{0}', space=smem, size = 0x200, scoped, tag = 'prefetched SMEM operand 0']
  %s0 = inlined_call_operand.hbm [shape: s32[2], index: 0, kind: input, shape index: {}]
  %s1 = inlined_call_operand.hbm [shape: f32[2,16,16,16], index: 1, kind: input, shape index: {}]
  %s2 = inlined_call_operand.hbm [shape: s32[2,16,16], index: 2, kind: input, shape index: {}]
  %s3 = inlined_call_operand.hbm [shape: f32[2,8,128], index: 3, kind: output, shape index: {}]
  %s4 = sld [smem:[#allocation0]]
  $region64: #{tpu_custom_call.1} parent=0
    _
  %s6 = ssub.s32 1, %s4
  %s7 = scalar_select 0, %s6, %s4
  %9 = dma.hbm_to_smem %s0, 16, [#allocation9], [#allocation8]
  %10 = dma.done [#allocation8], 16
  %11 = sfence
  $region1: #{tpu_custom_call.1} parent=0
    #allocation10 [shape = 'u8[131072]{0}', space=vmem, size = 0x20000, scoped, tag = 'input window, operand 1']
    #allocation11 [shape = 's32[2]{0}', space=sflag, size = 0x8, scoped, tag = 'scoped memory for tpu_custom_call.1']
    #allocation12 [shape = 's32[2]{0}', space=sflag, size = 0x8, scoped, tag = 'scoped memory for tpu_custom_call.1']
    #allocation13 [shape = 'u8[16384]{0}', space=vmem, size = 0x4000, scoped, tag = 'input window, operand 2']
    #allocation14 [shape = 's32[2]{0}', space=sflag, size = 0x8, scoped, tag = 'scoped memory for tpu_custom_call.1']
    #allocation15 [shape = 'u8[8192]{0}', space=vmem, size = 0x2000, scoped, tag = 'output window, operand 0']
    %12 = vsyncpa [#allocation11], 0
    %s13 = scalar_lea.sflag [#allocation11], 1
    %14 = vsyncpa %s13, 0
    %15 = vsyncpa [#allocation14], 0
    %s16 = scalar_lea.sflag [#allocation14], 1
    %17 = vsyncpa %s16, 0
    %18 = vsyncpa [#allocation12], 0
    %s19 = scalar_lea.sflag [#allocation12], 1
    %20 = vsyncpa %s19, 0
    loop: start=0, step=1, limit=6
    $region2: #{tpu_custom_call.1} parent=1 // loop_pre_header
      _
    $region3: #{tpu_custom_call.1} parent=1 // loop_header
      %s22 = sphi 0, %s26
      %p23 = scmp.ge.s32.totalorder %s22, 6
      %s29 = sphi 0, %s41
      %s30 = sphi 0, %s37
      %s31 = sphi 0, %s29
      %s32 = sphi 0, %s30
      %s33 = sphi 0, %s31
      %s34 = sphi 0, %s32
      %s46 = sphi 0, %s48
      %s49 = sphi 0, %s46
      %s50 = sphi 0, %s49
      %s66 = sphi 0, %s50
      %s72 = sphi 0, %s74
      %s75 = sphi 0, %s72
      %s76 = sphi 0, %s75
      %s92 = sphi 0, %s76
      %s98 = sphi 0, %s100
      %s101 = sphi 0, %s98
      %s102 = sphi 0, %s101
      %s118 = sphi 0, %s102
    $region4: #{tpu_custom_call.1} parent=1 // loop_header_branch
      %25 = sbr.rel (%p23) target = $region8
    $region5: #{tpu_custom_call.1} parent=1 // loop_body
      %s27 = ssub.s32 %s22, 1
      %s28 = ssub.s32 %s22, 2
      %s35 = sadd.s32 1, %s30
      %p36 = scmp.ge.s32.totalorder %s35, 2
      %s37 = scalar_select %p36, 0, %s35
      %s38 = sadd.s32 1, %s29
      %s39 = scalar_select %p36, %s38, %s29
      %p40 = scmp.ge.s32.totalorder %s39, 2
      %s41 = scalar_select %p40, 0, %s39
      %s42 = ssub.s32 %s29, %s41
      %s43 = ssub.s32 %s30, %s37
      %s44 = sor.u32 %s42, %s43
      %p45 = scmp.eq.s32.totalorder %s44, 0
      %s47 = sadd.s32 %s46, 1
      %s48 = scalar_select %p45, %s46, %s47
      %p51 = pneg %p45
      %p52 = scmp.eq.s32.totalorder %s22, 3
      %p53 = por %p51, %p52
      %p54 = scmp.ne.s32.totalorder %s46, %s49
      %p55 = scmp.eq.s32.totalorder %s22, 0
      %p56 = por %p54, %p55
      %p57 = scmp.ne.s32.totalorder %s46, %s49
      %p58 = scmp.eq.s32.totalorder %s27, 3
      %p59 = por %p57, %p58
      %p60 = scmp.ne.s32.totalorder %s49, %s50
      %p61 = scmp.eq.s32.totalorder %s27, 0
      %p62 = por %p60, %p61
      %p63 = scmp.ne.s32.totalorder %s49, %s50
      %p64 = scmp.eq.s32.totalorder %s28, 3
      %p65 = por %p63, %p64
      %p67 = scmp.ne.s32.totalorder %s50, %s66
      %p68 = scmp.eq.s32.totalorder %s28, 0
      %p69 = por %p67, %p68
      %s70 = ssub.s32 %s29, %s41
      %p71 = scmp.eq.s32.totalorder %s70, 0
      %s73 = sadd.s32 %s72, 1
      %s74 = scalar_select %p71, %s72, %s73
      %p77 = pneg %p71
      %p78 = scmp.eq.s32.totalorder %s22, 3
      %p79 = por %p77, %p78
      %p80 = scmp.ne.s32.totalorder %s72, %s75
      %p81 = scmp.eq.s32.totalorder %s22, 0
      %p82 = por %p80, %p81
      %p83 = scmp.ne.s32.totalorder %s72, %s75
      %p84 = scmp.eq.s32.totalorder %s27, 3
      %p85 = por %p83, %p84
      %p86 = scmp.ne.s32.totalorder %s75, %s76
      %p87 = scmp.eq.s32.totalorder %s27, 0
      %p88 = por %p86, %p87
      %p89 = scmp.ne.s32.totalorder %s75, %s76
      %p90 = scmp.eq.s32.totalorder %s28, 3
      %p91 = por %p89, %p90
      %p93 = scmp.ne.s32.totalorder %s76, %s92
      %p94 = scmp.eq.s32.totalorder %s28, 0
      %p95 = por %p93, %p94
      %s96 = ssub.s32 %s29, %s41
      %p97 = scmp.eq.s32.totalorder %s96, 0
      %s99 = sadd.s32 %s98, 1
      %s100 = scalar_select %p97, %s98, %s99
      %p103 = pneg %p97
      %p104 = scmp.eq.s32.totalorder %s22, 3
      %p105 = por %p103, %p104
      %p106 = scmp.ne.s32.totalorder %s98, %s101
      %p107 = scmp.eq.s32.totalorder %s22, 0
      %p108 = por %p106, %p107
      %p109 = scmp.ne.s32.totalorder %s98, %s101
      %p110 = scmp.eq.s32.totalorder %s27, 3
      %p111 = por %p109, %p110
      %p112 = scmp.ne.s32.totalorder %s101, %s102
      %p113 = scmp.eq.s32.totalorder %s27, 0
      %p114 = por %p112, %p113
      %p115 = scmp.ne.s32.totalorder %s101, %s102
      %p116 = scmp.eq.s32.totalorder %s28, 3
      %p117 = por %p115, %p116
      %p119 = scmp.ne.s32.totalorder %s102, %s118
      %p120 = scmp.eq.s32.totalorder %s28, 0
      %p121 = por %p119, %p120
      %p122 = scmp.le.s32.totalorder 1, %s22
      %p123 = scmp.lt.s32.totalorder %s22, 5
      %p124 = pnand %p122, %p123
      %p125 = pneg %p124
      // Predicated region
      $region9: #{tpu_custom_call.1} parent=5 // pred_check
        _
      $region10: #{tpu_custom_call.1} parent=5 // pred_check_branch
        %127 = sbr.rel (%p124) target = $region12
      $region11: #{tpu_custom_call.1} parent=5 // pred_region
        %s128 = ssub.s32 %s22, 1
      $region12: #{tpu_custom_call.1} parent=5 // pred_fallthru
        _
      %p129 = scmp.lt.s32.totalorder %s22, 4
      // Predicated region
      $region13: #{tpu_custom_call.1} parent=5 // pred_check
        %p130 = pneg %p129
      $region14: #{tpu_custom_call.1} parent=5 // pred_check_branch
        %132 = sbr.rel (%p130) target = $region16
      $region15: #{tpu_custom_call.1} parent=5 // pred_region
        // Predicated region
        $region17: #{tpu_custom_call.1} parent=15 // pred_check
          %p133 = pneg %p56
        $region18: #{tpu_custom_call.1} parent=15 // pred_check_branch
          %135 = sbr.rel (%p133) target = $region20
        $region19: #{tpu_custom_call.1} parent=15 // pred_region
          %s136 = sand.u32 %s46, 1
          %s137 = scalar_lea.sflag [#allocation11], %s136
          %s138 = sand.u32 %s46, 1
          %s139 = smul.addr %s138, 128
          %s140 = scalar_lea.vmem [#allocation10], %s139
          %s141 = smul.u32 8, %s30
          %s143 = ssub.s32 2048, 2048
          %144 = vsyncadd %s137, %s143
          %s145 = smul.addr %s141, 2
          %s146 = smul.addr %s29, 32
          %s147 = sadd.s32 %s145, %s146
          %s148 = smul.addr %s147, 128
          %s149 = scalar_lea.hbm %s1, %s148
          %s150 = sshll.u32 %s140, 4
          %s151 = int_to_ptr.vmem [resolvable:$true] %s150
          %156 = dma.hbm_to_vmem [thread:$0]  %s149, 2048, %s151, %s137, 128, 128, 8
        $region20: #{tpu_custom_call.1} parent=15 // pred_fallthru
          _
        // Predicated region
        $region21: #{tpu_custom_call.1} parent=15 // pred_check
          %p157 = pneg %p82
        $region22: #{tpu_custom_call.1} parent=15 // pred_check_branch
          %159 = sbr.rel (%p157) target = $region24
        $region23: #{tpu_custom_call.1} parent=15 // pred_region
          %s160 = sand.u32 %s72, 1
          %s161 = scalar_lea.sflag [#allocation14], %s160
          %s162 = sand.u32 %s72, 1
          %s163 = smul.addr %s162, 16
          %s164 = scalar_lea.vmem [#allocation13], %s163
          %s166 = ssub.s32 256, 256
          %167 = vsyncadd %s161, %s166
          %s168 = smul.addr %s29, 2
          %s169 = smul.addr %s168, 128
          %s170 = scalar_lea.hbm %s2, %s169
          %s171 = sshll.u32 %s164, 4
          %s172 = int_to_ptr.vmem [resolvable:$true] %s171
          %177 = dma.hbm_to_vmem [thread:$0]  %s170, 256, %s172, %s161, 128, 128, 8
        $region24: #{tpu_custom_call.1} parent=15 // pred_fallthru
          _
      $region16: #{tpu_custom_call.1} parent=5 // pred_fallthru
        _
      %p178 = scmp.le.s32.totalorder 1, %s22
      %p179 = scmp.lt.s32.totalorder %s22, 5
      %p180 = pnand %p178, %p179
      %p181 = pneg %p180
      // Predicated region
      $region25: #{tpu_custom_call.1} parent=5 // pred_check
        _
      $region26: #{tpu_custom_call.1} parent=5 // pred_check_branch
        %183 = sbr.rel (%p180) target = $region28
      $region27: #{tpu_custom_call.1} parent=5 // pred_region
        %s184 = ssub.s32 %s22, 1
        %s185 = sand.u32 %s49, 1
        %s186 = scalar_lea.sflag [#allocation11], %s185
        %s187 = sand.u32 %s49, 1
        %s188 = smul.addr %s187, 128
        %s189 = scalar_lea.vmem [#allocation10], %s188
        // Predicated region
        $region29: #{tpu_custom_call.1} parent=27 // pred_check
          %p190 = pneg %p62
        $region30: #{tpu_custom_call.1} parent=27 // pred_check_branch
          %192 = sbr.rel (%p190) target = $region32
        $region31: #{tpu_custom_call.1} parent=27 // pred_region
          %193 = dma.done %s186, 2048
        $region32: #{tpu_custom_call.1} parent=27 // pred_fallthru
          _
        %s194 = sand.u32 %s75, 1
        %s195 = scalar_lea.sflag [#allocation14], %s194
        %s196 = sand.u32 %s75, 1
        %s197 = smul.addr %s196, 16
        %s198 = scalar_lea.vmem [#allocation13], %s197
        // Predicated region
        $region33: #{tpu_custom_call.1} parent=27 // pred_check
          %p199 = pneg %p88
        $region34: #{tpu_custom_call.1} parent=27 // pred_check_branch
          %201 = sbr.rel (%p199) target = $region36
        $region35: #{tpu_custom_call.1} parent=27 // pred_region
          %202 = dma.done %s195, 256
        $region36: #{tpu_custom_call.1} parent=27 // pred_fallthru
          _
        %s203 = sand.u32 %s49, 1
        %s204 = scalar_lea.sflag [#allocation11], %s203
        %s205 = sand.u32 %s49, 1
        %s206 = smul.addr %s205, 128
        %s207 = scalar_lea.vmem [#allocation10], %s206
        %p208 = pneg %p62
        %p209 = pneg %p59
        %s210 = sand.u32 %s75, 1
        %s211 = scalar_lea.sflag [#allocation14], %s210
        %s212 = sand.u32 %s75, 1
        %s213 = smul.addr %s212, 16
        %s214 = scalar_lea.vmem [#allocation13], %s213
        %p215 = pneg %p88
        %p216 = pneg %p85
        %p217 = pneg %p114
        %p218 = pneg %p111
        %s219 = sand.u32 %s101, 1
        %s220 = scalar_lea.sflag [#allocation12], %s219
        %s221 = sand.u32 %s101, 1
        %s222 = smul.addr %s221, 8
        %s223 = scalar_lea.vmem [#allocation15], %s222
        %s224 = smul.u32 8, %s32
        %s225 = sld [smem:[#allocation9 + %s31]]
        %v226 = vld [vmem:[%s189] sm:$0xff]
        %v227 = vld [vmem:[%s189 + $0x8] sm:$0xff]
        %v228 = vld [vmem:[%s189 + $0x10] sm:$0xff]
        %v229 = vld [vmem:[%s189 + $0x18] sm:$0xff]
        %v230 = vld [vmem:[%s189 + $0x20] sm:$0xff]
        %v231 = vld [vmem:[%s189 + $0x28] sm:$0xff]
        %v232 = vld [vmem:[%s189 + $0x30] sm:$0xff]
        %v233 = vld [vmem:[%s189 + $0x38] sm:$0xff]
        %v234 = vld [vmem:[%s189 + $0x40] sm:$0xff]
        %v235 = vld [vmem:[%s189 + $0x48] sm:$0xff]
        %v236 = vld [vmem:[%s189 + $0x50] sm:$0xff]
        %v237 = vld [vmem:[%s189 + $0x58] sm:$0xff]
        %v238 = vld [vmem:[%s189 + $0x60] sm:$0xff]
        %v239 = vld [vmem:[%s189 + $0x68] sm:$0xff]
        %v240 = vld [vmem:[%s189 + $0x70] sm:$0xff]
        %v241 = vld [vmem:[%s189 + $0x78] sm:$0xff]
        %v242 = vld [vmem:[%s198] sm:$0xff]
        %v243 = vld [vmem:[%s198 + $0x8] sm:$0xff]
        %vm244 = vcmp.gt.s32.totalorder %v242, 0
        %v245 = vsel %vm244, %v242, 0
        %vm246 = vcmp.gt.s32.totalorder %v243, 0
        %v247 = vsel %vm246, %v243, 0
        %p248 = scmp.eq.s32.totalorder %s32, 0
        // Predicated region
        $region37: #{tpu_custom_call.1} parent=27 // pred_check
          %p249 = pneg %p248
        $region38: #{tpu_custom_call.1} parent=27 // pred_check_branch
          %251 = sbr.rel (%p249) target = $region40
        $region39: #{tpu_custom_call.1} parent=27 // pred_region
          %vm252 = vcmask 130048
          %253 = vst.msk [vmem:[#allocation3] sm:$0xff] %vm252, %v226
          %254 = vst.msk [vmem:[#allocation3 + $0x8] sm:$0xff] %vm252, %v227
          %255 = vst.msk [vmem:[#allocation2] sm:$0xff] %vm252, -1e+30
          %256 = vst.msk [vmem:[#allocation2 + $0x8] sm:$0xff] %vm252, -1e+30
          %257 = vst.msk [vmem:[#allocation4] sm:$0xff] %vm252, 0.0
          %258 = vst.msk [vmem:[#allocation4 + $0x8] sm:$0xff] %vm252, 0.0
        $region40: #{tpu_custom_call.1} parent=27 // pred_fallthru
          _
        %s259 = smul.u32 %s32, 8
        %v260 = vstv %s259
        %v261 = vadd.s32 %v260, 1
        %v262 = vadd.s32 %v260, 2
        %v263 = vadd.s32 %v260, 3
        %v264 = vadd.s32 %v260, 4
        %v265 = vadd.s32 %v260, 5
        %v266 = vadd.s32 %v260, 6
        %v267 = vadd.s32 %v260, 7
        %vm268 = vcmp.eq.s32.totalorder %v260, %v245
        %vm269 = vcmp.eq.s32.totalorder %v260, %v247
        %vm270 = vcmp.eq.s32.totalorder %v261, %v245
        %vm271 = vcmp.eq.s32.totalorder %v261, %v247
        %vm272 = vcmp.eq.s32.totalorder %v262, %v245
        %vm273 = vcmp.eq.s32.totalorder %v262, %v247
        %vm274 = vcmp.eq.s32.totalorder %v263, %v245
        %vm275 = vcmp.eq.s32.totalorder %v263, %v247
        %vm276 = vcmp.eq.s32.totalorder %v264, %v245
        %vm277 = vcmp.eq.s32.totalorder %v264, %v247
        %vm278 = vcmp.eq.s32.totalorder %v265, %v245
        %vm279 = vcmp.eq.s32.totalorder %v265, %v247
        %vm280 = vcmp.eq.s32.totalorder %v266, %v245
        %vm281 = vcmp.eq.s32.totalorder %v266, %v247
        %vm282 = vcmp.eq.s32.totalorder %v267, %v245
        %vm283 = vcmp.eq.s32.totalorder %v267, %v247
        %v284 = vsel %vm268, 0.0, 1.0
        %v285 = vsel %vm269, 0.0, 1.0
        %v286 = vsel %vm270, 0.0, 1.0
        %v287 = vsel %vm271, 0.0, 1.0
        %v288 = vsel %vm272, 0.0, 1.0
        %v289 = vsel %vm273, 0.0, 1.0
        %v290 = vsel %vm274, 0.0, 1.0
        %v291 = vsel %vm275, 0.0, 1.0
        %v292 = vsel %vm276, 0.0, 1.0
        %v293 = vsel %vm277, 0.0, 1.0
        %v294 = vsel %vm278, 0.0, 1.0
        %v295 = vsel %vm279, 0.0, 1.0
        %v296 = vsel %vm280, 0.0, 1.0
        %v297 = vsel %vm281, 0.0, 1.0
        %v298 = vsel %vm282, 0.0, 1.0
        %v299 = vsel %vm283, 0.0, 1.0
        %v300 = vlaneseq
        %v301 = vshrl.u32 %v300, 7
        %v302 = vadd.s32 %v301, 8
        %v303 = vlaneseq
        %v304 = vand.u32 %v303, 127
        %vm305 = vcmp.eq.s32.totalorder %v301, 0
        %vm306 = vcmp.eq.s32.totalorder %v302, 0
        %s307 = ssub.s32 %s225, 1
        %v308 = vstv %s307
        %vm309 = vcmp.eq.s32.totalorder %v304, %v308
        %vm310 = vmand %vm305, %vm309
        %vm311 = vmand %vm306, %vm309
        %vm312 = vcmp.eq.s32.totalorder %v260, 0
        %vm313 = vcmp.eq.s32.totalorder %v261, 0
        %vm314 = vcmp.eq.s32.totalorder %v262, 0
        %vm315 = vcmp.eq.s32.totalorder %v263, 0
        %vm316 = vcmp.eq.s32.totalorder %v264, 0
        %vm317 = vcmp.eq.s32.totalorder %v265, 0
        %vm318 = vcmp.eq.s32.totalorder %v266, 0
        %vm319 = vcmp.eq.s32.totalorder %v267, 0
        %vm320 = vmand %vm310, %vm312
        %vm321 = vmand %vm311, %vm312
        %vm322 = vmand %vm310, %vm313
        %vm323 = vmand %vm311, %vm313
        %vm324 = vmand %vm310, %vm314
        %vm325 = vmand %vm311, %vm314
        %vm326 = vmand %vm310, %vm315
        %vm327 = vmand %vm311, %vm315
        %vm328 = vmand %vm310, %vm316
        %vm329 = vmand %vm311, %vm316
        %vm330 = vmand %vm310, %vm317
        %vm331 = vmand %vm311, %vm317
        %vm332 = vmand %vm310, %vm318
        %vm333 = vmand %vm311, %vm318
        %vm334 = vmand %vm310, %vm319
        %vm335 = vmand %vm311, %vm319
        %v336 = vsel %vm320, 1e+09, 0.0
        %v337 = vsel %vm321, 1e+09, 0.0
        %v338 = vsel %vm322, 1e+09, 0.0
        %v339 = vsel %vm323, 1e+09, 0.0
        %v340 = vsel %vm324, 1e+09, 0.0
        %v341 = vsel %vm325, 1e+09, 0.0
        %v342 = vsel %vm326, 1e+09, 0.0
        %v343 = vsel %vm327, 1e+09, 0.0
        %v344 = vsel %vm328, 1e+09, 0.0
        %v345 = vsel %vm329, 1e+09, 0.0
        %v346 = vsel %vm330, 1e+09, 0.0
        %v347 = vsel %vm331, 1e+09, 0.0
        %v348 = vsel %vm332, 1e+09, 0.0
        %v349 = vsel %vm333, 1e+09, 0.0
        %v350 = vsel %vm334, 1e+09, 0.0
        %v351 = vsel %vm335, 1e+09, 0.0
        %v352 = vsub.f32 %v284, %v336
        %v353 = vsub.f32 %v285, %v337
        %v354 = vsub.f32 %v286, %v338
        %v355 = vsub.f32 %v287, %v339
        %v356 = vsub.f32 %v288, %v340
        %v357 = vsub.f32 %v289, %v341
        %v358 = vsub.f32 %v290, %v342
        %v359 = vsub.f32 %v291, %v343
        %v360 = vsub.f32 %v292, %v344
        %v361 = vsub.f32 %v293, %v345
        %v362 = vsub.f32 %v294, %v346
        %v363 = vsub.f32 %v295, %v347
        %v364 = vsub.f32 %v296, %v348
        %v365 = vsub.f32 %v297, %v349
        %v366 = vsub.f32 %v298, %v350
        %v367 = vsub.f32 %v299, %v351
        %v368 = vld [vmem:[#allocation2] sm:$0xff]
        %v369 = vld [vmem:[#allocation2 + $0x8] sm:$0xff]
        %v370 = vadd.f32 %v226, %v352
        %v371 = vadd.f32 %v227, %v353
        %v372 = vadd.f32 %v228, %v354
        %v373 = vadd.f32 %v229, %v355
        %v374 = vadd.f32 %v230, %v356
        %v375 = vadd.f32 %v231, %v357
        %v376 = vadd.f32 %v232, %v358
        %v377 = vadd.f32 %v233, %v359
        %v378 = vadd.f32 %v234, %v360
        %v379 = vadd.f32 %v235, %v361
        %v380 = vadd.f32 %v236, %v362
        %v381 = vadd.f32 %v237, %v363
        %v382 = vadd.f32 %v238, %v364
        %v383 = vadd.f32 %v239, %v365
        %v384 = vadd.f32 %v240, %v366
        %v385 = vadd.f32 %v241, %v367
        %vm386 = vcmask 130048
        %v387 = vsel %vm386, %v370, -inf
        %v388 = vsel %vm386, %v372, -inf
        %v389 = vsel %vm386, %v374, -inf
        %v390 = vmax.f32 %v387, %v389
        %v391 = vsel %vm386, %v376, -inf
        %v392 = vmax.f32 %v388, %v391
        %v393 = vsel %vm386, %v378, -inf
        %v394 = vmax.f32 %v390, %v393
        %v395 = vsel %vm386, %v380, -inf
        %v396 = vmax.f32 %v392, %v395
        %v397 = vsel %vm386, %v382, -inf
        %v398 = vmax.f32 %v394, %v397
        %v399 = vsel %vm386, %v384, -inf
        %v400 = vmax.f32 %v396, %v399
        %v401 = vmax.f32 %v398, %v400
        %v402 = vsel %vm386, %v371, -inf
        %v403 = vsel %vm386, %v373, -inf
        %v404 = vsel %vm386, %v375, -inf
        %v405 = vmax.f32 %v402, %v404
        %v406 = vsel %vm386, %v377, -inf
        %v407 = vmax.f32 %v403, %v406
        %v408 = vsel %vm386, %v379, -inf
        %v409 = vmax.f32 %v405, %v408
        %v410 = vsel %vm386, %v381, -inf
        %v411 = vmax.f32 %v407, %v410
        %v412 = vsel %vm386, %v383, -inf
        %v413 = vmax.f32 %v409, %v412
        %v414 = vsel %vm386, %v385, -inf
        %v415 = vmax.f32 %v411, %v414
        %v416 = vmax.f32 %v413, %v415
        %v417 = vmax.f32 %v368, %v401
        %v418 = vmax.f32 %v369, %v416
        %419 = vst.msk [vmem:[#allocation2] sm:$0xff] %vm386, %v417
        %420 = vst.msk [vmem:[#allocation2 + $0x8] sm:$0xff] %vm386, %v418
        %v421 = vld [vmem:[#allocation4] sm:$0xff]
        %v422 = vld [vmem:[#allocation4 + $0x8] sm:$0xff]
        %v423 = vsel %vm268, %v226, 0.0
        %v424 = vsel %vm269, %v227, 0.0
        %v425 = vsel %vm270, %v228, 0.0
        %v426 = vsel %vm271, %v229, 0.0
        %v427 = vsel %vm272, %v230, 0.0
        %v428 = vsel %vm273, %v231, 0.0
        %v429 = vsel %vm274, %v232, 0.0
        %v430 = vsel %vm275, %v233, 0.0
        %v431 = vsel %vm276, %v234, 0.0
        %v432 = vsel %vm277, %v235, 0.0
        %v433 = vsel %vm278, %v236, 0.0
        %v434 = vsel %vm279, %v237, 0.0
        %v435 = vsel %vm280, %v238, 0.0
        %v436 = vsel %vm281, %v239, 0.0
        %v437 = vsel %vm282, %v240, 0.0
        %v438 = vsel %vm283, %v241, 0.0
        %v439 = vsel %vm386, %v423, 0.0
        %v440 = vsel %vm386, %v425, 0.0
        %v441 = vadd.f32 %v439, %v440
        %v442 = vsel %vm386, %v427, 0.0
        %v443 = vadd.f32 %v441, %v442
        %v444 = vsel %vm386, %v429, 0.0
        %v445 = vadd.f32 %v443, %v444
        %v446 = vsel %vm386, %v431, 0.0
        %v447 = vadd.f32 %v445, %v446
        %v448 = vsel %vm386, %v433, 0.0
        %v449 = vadd.f32 %v447, %v448
        %v450 = vsel %vm386, %v435, 0.0
        %v451 = vadd.f32 %v449, %v450
        %v452 = vsel %vm386, %v437, 0.0
        %v453 = vadd.f32 %v451, %v452
        %v454 = vsel %vm386, %v424, 0.0
        %v455 = vsel %vm386, %v426, 0.0
        %v456 = vadd.f32 %v454, %v455
        %v457 = vsel %vm386, %v428, 0.0
        %v458 = vadd.f32 %v456, %v457
        %v459 = vsel %vm386, %v430, 0.0
        %v460 = vadd.f32 %v458, %v459
        %v461 = vsel %vm386, %v432, 0.0
        %v462 = vadd.f32 %v460, %v461
        %v463 = vsel %vm386, %v434, 0.0
        %v464 = vadd.f32 %v462, %v463
        %v465 = vsel %vm386, %v436, 0.0
        %v466 = vadd.f32 %v464, %v465
        %v467 = vsel %vm386, %v438, 0.0
        %v468 = vadd.f32 %v466, %v467
        %v469 = vadd.f32 %v421, %v453
        %v470 = vadd.f32 %v422, %v468
        %471 = vst.msk [vmem:[#allocation4] sm:$0xff] %vm386, %v469
        %472 = vst.msk [vmem:[#allocation4 + $0x8] sm:$0xff] %vm386, %v470
        %p473 = scmp.eq.s32.totalorder %s32, 1
        // Predicated region
        $region41: #{tpu_custom_call.1} parent=27 // pred_check
          %p474 = pneg %p473
        $region42: #{tpu_custom_call.1} parent=27 // pred_check_branch
          %476 = sbr.rel (%p474) target = $region44
        $region43: #{tpu_custom_call.1} parent=27 // pred_region
          %v477 = vld [vmem:[#allocation2] sm:$0xff]
          %v478 = vld [vmem:[#allocation2 + $0x8] sm:$0xff]
          %v479 = vld [vmem:[#allocation3] sm:$0xff]
          %v480 = vld [vmem:[#allocation3 + $0x8] sm:$0xff]
          %v481 = vsub.f32 %v477, %v479
          %v482 = vsub.f32 %v478, %v480
          %483 = vst.msk [vmem:[#allocation7] sm:$0xff] %vm386, %v481
          %484 = vst.msk [vmem:[#allocation7 + $0x8] sm:$0xff] %vm386, %v482
          %v485 = vld [vmem:[#allocation7] sm:$0xff]
          %v486 = vld [vmem:[#allocation7 + $0x8] sm:$0xff]
          %489 = vrot.lane.b32.xlu0 %v485, 127
          %v490 = vpop.permute.xlu0 %489
          %491 = vrot.lane.b32.xlu0 %v486, 127
          %v492 = vpop.permute.xlu0 %491
          %vm495 = vcmask 121856
          %496 = vst.msk [vmem:[#allocation7] sm:$0xff] %vm495, %v490
          %497 = vst.msk [vmem:[#allocation7 + $0x8] sm:$0xff] %vm495, %v492
          %498 = vrot.lane.b32.xlu0 %v485, 15
          %v499 = vpop.permute.xlu0 %498
          %500 = vrot.lane.b32.xlu0 %v486, 15
          %v501 = vpop.permute.xlu0 %500
          %vm504 = vcmask 130168
          %505 = vst.msk [vmem:[#allocation7] sm:$0xff] %vm504, %v499
          %506 = vst.msk [vmem:[#allocation7 + $0x8] sm:$0xff] %vm504, %v501
          %v507 = vld [vmem:[#allocation7] sm:$0xff]
          %v508 = vld [vmem:[#allocation7 + $0x8] sm:$0xff]
          %v509 = vand.u32 %v301, 1
          %v510 = vand.u32 %v302, 1
          %vm511 = vcmp.ne.s32.totalorder %v509, 0
          %vm512 = vcmp.ne.s32.totalorder %v510, 0
          %v513 = vsel %vm511, %v507, %v485
          %v514 = vsel %vm512, %v508, %v486
          %515 = vst.msk [vmem:[#allocation7] sm:$0xff] %vm386, %v513
          %516 = vst.msk [vmem:[#allocation7 + $0x8] sm:$0xff] %vm386, %v514
          %v517 = vld [vmem:[#allocation7] sm:$0xff]
          %v518 = vld [vmem:[#allocation7 + $0x8] sm:$0xff]
          %521 = vrot.lane.b32.xlu0 %v517, 126
          %v522 = vpop.permute.xlu0 %521
          %523 = vrot.lane.b32.xlu0 %v518, 126
          %v524 = vpop.permute.xlu0 %523
          %vm527 = vcmask 113664
          %528 = vst.msk [vmem:[#allocation7] sm:$0xff] %vm527, %v522
          %529 = vst.msk [vmem:[#allocation7 + $0x8] sm:$0xff] %vm527, %v524
          %530 = vrot.lane.b32.xlu0 %v517, 14
          %v531 = vpop.permute.xlu0 %530
          %532 = vrot.lane.b32.xlu0 %v518, 14
          %v533 = vpop.permute.xlu0 %532
          %vm536 = vcmask 130160
          %537 = vst.msk [vmem:[#allocation7] sm:$0xff] %vm536, %v531
          %538 = vst.msk [vmem:[#allocation7 + $0x8] sm:$0xff] %vm536, %v533
          %v539 = vld [vmem:[#allocation7] sm:$0xff]
          %v540 = vld [vmem:[#allocation7 + $0x8] sm:$0xff]
          %v541 = vand.u32 %v301, 2
          %v542 = vand.u32 %v302, 2
          %vm543 = vcmp.ne.s32.totalorder %v541, 0
          %vm544 = vcmp.ne.s32.totalorder %v542, 0
          %v545 = vsel %vm543, %v539, %v517
          %v546 = vsel %vm544, %v540, %v518
          %547 = vst.msk [vmem:[#allocation7] sm:$0xff] %vm386, %v545
          %548 = vst.msk [vmem:[#allocation7 + $0x8] sm:$0xff] %vm386, %v546
          %v549 = vld [vmem:[#allocation7] sm:$0xff]
          %v550 = vld [vmem:[#allocation7 + $0x8] sm:$0xff]
          %553 = vrot.lane.b32.xlu0 %v549, 124
          %v554 = vpop.permute.xlu0 %553
          %555 = vrot.lane.b32.xlu0 %v550, 124
          %v556 = vpop.permute.xlu0 %555
          %vm559 = vcmask 97280
          %560 = vst.msk [vmem:[#allocation7] sm:$0xff] %vm559, %v554
          %561 = vst.msk [vmem:[#allocation7 + $0x8] sm:$0xff] %vm559, %v556
          %562 = vrot.lane.b32.xlu0 %v549, 12
          %v563 = vpop.permute.xlu0 %562
          %564 = vrot.lane.b32.xlu0 %v550, 12
          %v565 = vpop.permute.xlu0 %564
          %vm568 = vcmask 130144
          %569 = vst.msk [vmem:[#allocation7] sm:$0xff] %vm568, %v563
          %570 = vst.msk [vmem:[#allocation7 + $0x8] sm:$0xff] %vm568, %v565
          %v571 = vld [vmem:[#allocation7] sm:$0xff]
          %v572 = vld [vmem:[#allocation7 + $0x8] sm:$0xff]
          %v573 = vand.u32 %v301, 4
          %v574 = vand.u32 %v302, 4
          %vm575 = vcmp.ne.s32.totalorder %v573, 0
          %vm576 = vcmp.ne.s32.totalorder %v574, 0
          %v577 = vsel %vm575, %v571, %v549
          %v578 = vsel %vm576, %v572, %v550
          %579 = vst.msk [vmem:[#allocation7] sm:$0xff] %vm386, %v577
          %580 = vst.msk [vmem:[#allocation7 + $0x8] sm:$0xff] %vm386, %v578
          %v581 = vld [vmem:[#allocation7] sm:$0xff]
          %v582 = vld [vmem:[#allocation7 + $0x8] sm:$0xff]
          %585 = vrot.lane.b32.xlu0 %v581, 120
          %v586 = vpop.permute.xlu0 %585
          %587 = vrot.lane.b32.xlu0 %v582, 120
          %v588 = vpop.permute.xlu0 %587
          %vm591 = vcmask 64512
          %592 = vst.msk [vmem:[#allocation7] sm:$0xff] %vm591, %v586
          %593 = vst.msk [vmem:[#allocation7 + $0x8] sm:$0xff] %vm591, %v588
          %594 = vrot.lane.b32.xlu0 %v581, 8
          %v595 = vpop.permute.xlu0 %594
          %596 = vrot.lane.b32.xlu0 %v582, 8
          %v597 = vpop.permute.xlu0 %596
          %vm600 = vcmask 130112
          %601 = vst.msk [vmem:[#allocation7] sm:$0xff] %vm600, %v595
          %602 = vst.msk [vmem:[#allocation7 + $0x8] sm:$0xff] %vm600, %v597
          %v603 = vld [vmem:[#allocation7] sm:$0xff]
          %v604 = vld [vmem:[#allocation7 + $0x8] sm:$0xff]
          %v605 = vand.u32 %v301, 8
          %v606 = vand.u32 %v302, 8
          %vm607 = vcmp.ne.s32.totalorder %v605, 0
          %vm608 = vcmp.ne.s32.totalorder %v606, 0
          %v609 = vsel %vm607, %v603, %v581
          %v610 = vsel %vm608, %v604, %v582
          %611 = vst.msk [vmem:[#allocation7] sm:$0xff] %vm386, %v609
          %612 = vst.msk [vmem:[#allocation7 + $0x8] sm:$0xff] %vm386, %v610
          %v613 = vld [vmem:[#allocation7] sm:$0xff]
          %v614 = vld [vmem:[#allocation7 + $0x8] sm:$0xff]
          %vm615 = vcmp.eq.s32.totalorder %v304, 0
          %617 = vset.pattern.permute.xlu0 0
          %618 = vperm.xlu0 %617, %v613
          %v619 = vpop.permute.xlu0 %618
          %622 = vset.pattern.permute.xlu0 0
          %623 = vperm.xlu0 %622, %v614
          %v624 = vpop.permute.xlu0 %623
          %v626 = vsel %vm615, %v619, 0.0
          %v627 = vsel %vm615, %v624, 0.0
          %628 = vst.msk [vmem:[#allocation5] sm:$0xff] %vm386, %v626
          %629 = vst.msk [vmem:[#allocation5 + $0x8] sm:$0xff] %vm386, %v627
          %vm630 = vcmp.eq.s32.totalorder %v304, 15
          %v631 = vsel %vm630, %v619, 0.0
          %v632 = vsel %vm630, %v624, 0.0
          %633 = vst.msk [vmem:[#allocation6] sm:$0xff] %vm386, %v631
          %634 = vst.msk [vmem:[#allocation6 + $0x8] sm:$0xff] %vm386, %v632
          loop: start=1, step=1, limit=16
          $region45: #{tpu_custom_call.1} parent=43 // loop_pre_header
            _
          $region46: #{tpu_custom_call.1} parent=43 // loop_header
            %s636 = sphi 1, %s640
            %p637 = scmp.ge.s32.totalorder %s636, 16
          $region47: #{tpu_custom_call.1} parent=43 // loop_header_branch
            %639 = sbr.rel (%p637) target = $region51
          $region48: #{tpu_custom_call.1} parent=43 // loop_body
            %v641 = vld [vmem:[#allocation7] sm:$0xff]
            %v642 = vld [vmem:[#allocation7 + $0x8] sm:$0xff]
            %645 = vrot.lane.b32.xlu0 %v641, 127
            %v646 = vpop.permute.xlu0 %645
            %647 = vrot.lane.b32.xlu0 %v642, 127
            %v648 = vpop.permute.xlu0 %647
            %651 = vst.msk [vmem:[#allocation7] sm:$0xff] %vm495, %v646
            %652 = vst.msk [vmem:[#allocation7 + $0x8] sm:$0xff] %vm495, %v648
            %v653 = vld [vmem:[#allocation6 + $0x1] sm:$0xff]
            %v654 = vld [vmem:[#allocation6 + $0x9] sm:$0x7f]
            %657 = vrot.lane.b32.xlu0 %v653, 1
            %v658 = vpop.permute.xlu0 %657
            %659 = vrot.lane.b32.xlu0 %v654, 1
            %v660 = vpop.permute.xlu0 %659
            %vm663 = vcmask 130056
            %664 = vst.msk [vmem:[#allocation6] sm:$0xff] %vm663, %v658
            %vm665 = vcmask 129032
            %666 = vst.msk [vmem:[#allocation6 + $0x8] sm:$0x7f] %vm665, %v660
            %667 = vrot.lane.b32.xlu0 %v653, 113
            %v668 = vpop.permute.xlu0 %667
            %669 = vrot.lane.b32.xlu0 %v654, 113
            %v670 = vpop.permute.xlu0 %669
            %vm673 = vcmask 7168
            %674 = vst.msk [vmem:[#allocation6] sm:$0xff] %vm673, %v668
            %vm675 = vcmask 6144
            %676 = vst.msk [vmem:[#allocation6 + $0x8] sm:$0x7f] %vm675, %v670
            %v677 = vld [vmem:[#allocation5] sm:$0xff]
            %v678 = vld [vmem:[#allocation5 + $0x8] sm:$0xff]
            %v679 = vld [vmem:[#allocation6] sm:$0xff]
            %v680 = vld [vmem:[#allocation6 + $0x8] sm:$0xff]
            %v681 = vstv %s636
            %vm682 = vcmp.lt.s32.totalorder %v304, %v681
            %v683 = vadd.f32 %v677, %v679
            %v684 = vadd.f32 %v678, %v680
            %v685 = vsel %vm682, %v683, -1e+30
            %v686 = vsel %vm682, %v684, -1e+30
            %v687 = vsel %vm386, %v685, -inf
            %688 = vmax.xlane.f32.xlu0 %v687
            %v689 = vpop.xlane.xlu0 %688
            %v690 = vsel %vm386, %v686, -inf
            %691 = vmax.xlane.f32.xlu0 %v690
            %v692 = vpop.xlane.xlu0 %691
            %v693 = vld [vmem:[#allocation7] sm:$0xff]
            %v694 = vld [vmem:[#allocation7 + $0x8] sm:$0xff]
            %v695 = vadd.f32 %v689, %v693
            %v696 = vadd.f32 %v692, %v694
            %vm697 = vcmp.eq.s32.totalorder %v304, %v681
            %699 = vset.pattern.permute.xlu0 0
            %700 = vperm.xlu0 %699, %v695
            %v701 = vpop.permute.xlu0 %700
            %704 = vset.pattern.permute.xlu0 0
            %705 = vperm.xlu0 %704, %v696
            %v706 = vpop.permute.xlu0 %705
            %v708 = vsel %vm697, %v701, %v677
            %v709 = vsel %vm697, %v706, %v678
            %710 = vst.msk [vmem:[#allocation5] sm:$0xff] %vm386, %v708
            %711 = vst.msk [vmem:[#allocation5 + $0x8] sm:$0xff] %vm386, %v709
            %v712 = vsel %vm630, %v701, %v679
            %v713 = vsel %vm630, %v706, %v680
            %714 = vst.msk [vmem:[#allocation6] sm:$0xff] %vm386, %v712
            %715 = vst.msk [vmem:[#allocation6 + $0x8] sm:$0xff] %vm386, %v713
          $region49: #{tpu_custom_call.1} parent=43 // loop_footer
            %s640 = sadd.s32 1, %s636
          $region50: #{tpu_custom_call.1} parent=43 // loop_footer_branch
            %635 = sbr.rel target = $region46
          $region51: #{tpu_custom_call.1} parent=43 // loop_exit
            _
          %v716 = vld [vmem:[#allocation5] sm:$0x1]
          %v717 = vsel %vm309, %v716, 0.0
          %vm718 = vcmask 122880
          %v719 = vsel %vm718, %v717, 0.0
          %720 = vadd.xlane.f32.xlu0 %v719
          %v721 = vpop.xlane.xlu0 %720
          %v722 = vld [vmem:[#allocation4] sm:$0xff]
          %v723 = vld [vmem:[#allocation4 + $0x8] sm:$0xff]
          %v724 = vld [vmem:[#allocation3] sm:$0xff]
          %v725 = vld [vmem:[#allocation3 + $0x8] sm:$0xff]
          %v726 = vsub.f32 %v722, %v724
          %v727 = vsub.f32 %v723, %v725
          %v728 = vsel %vm386, %v726, 0.0
          %729 = vadd.xlane.f32.xlu0 %v728
          %v730 = vpop.xlane.xlu0 %729
          %v731 = vsel %vm386, %v727, 0.0
          %732 = vadd.xlane.f32.xlu0 %v731
          %v733 = vpop.xlane.xlu0 %732
          %v734 = vadd.f32 %v730, %v733
          %v735 = vrot.slane %v734, 4
          %v736 = vadd.f32 %v734, %v735
          %v737 = vrot.slane %v736, 2
          %v738 = vadd.f32 %v736, %v737
          %v739 = vrot.slane %v738, 1
          %v740 = vadd.f32 %v738, %v739
          %v741 = vsub.f32 %v721, %v740
          %v742 = vmax.f32 %v741, 0.0
          %v743 = vlaneseq
          %v744 = vshrl.u32 %v743, 7
          %v745 = vsub.s32 0, %v744
          %v746 = vrot.slane %v742, %v745
          %v747 = vadd.f32 %v746, 0.0
          %748 = vst [vmem:[%s223] sm:$0xff] %v747
        $region44: #{tpu_custom_call.1} parent=27 // pred_fallthru
          _
        %s749 = sand.u32 %s101, 1
        %s750 = scalar_lea.sflag [#allocation12], %s749
        %s751 = sand.u32 %s101, 1
        %s752 = smul.addr %s751, 8
        %s753 = scalar_lea.vmem [#allocation15], %s752
        // Predicated region
        $region52: #{tpu_custom_call.1} parent=27 // pred_check
          %p754 = pneg %p111
        $region53: #{tpu_custom_call.1} parent=27 // pred_check_branch
          %756 = sbr.rel (%p754) target = $region55
        $region54: #{tpu_custom_call.1} parent=27 // pred_region
          %s758 = ssub.s32 128, 128
          %759 = vsyncadd %s750, %s758
          %s760 = smul.addr %s31, 128
          %s761 = scalar_lea.hbm %s3, %s760
          %s763 = sshll.u32 %s753, 4
          %s764 = int_to_ptr.vmem [resolvable:$true] %s763
          %766 = dma.vmem_to_hbm [thread:$0]  %s764, 128, %s761, %s750
        $region55: #{tpu_custom_call.1} parent=27 // pred_fallthru
          _
      $region28: #{tpu_custom_call.1} parent=5 // pred_fallthru
        _
      %p767 = scmp.le.s32.totalorder 2, %s22
      // Predicated region
      $region56: #{tpu_custom_call.1} parent=5 // pred_check
        %p768 = pneg %p767
      $region57: #{tpu_custom_call.1} parent=5 // pred_check_branch
        %770 = sbr.rel (%p768) target = $region59
      $region58: #{tpu_custom_call.1} parent=5 // pred_region
        %s771 = ssub.s32 %s22, 2
        // Predicated region
        $region60: #{tpu_custom_call.1} parent=58 // pred_check
          %p772 = pneg %p117
        $region61: #{tpu_custom_call.1} parent=58 // pred_check_branch
          %774 = sbr.rel (%p772) target = $region63
        $region62: #{tpu_custom_call.1} parent=58 // pred_region
          %s775 = sand.u32 %s102, 1
          %s776 = scalar_lea.sflag [#allocation12], %s775
          %s777 = sand.u32 %s102, 1
          %s778 = smul.addr %s777, 8
          %s779 = scalar_lea.vmem [#allocation15], %s778
          %780 = dma.done %s776, 128
        $region63: #{tpu_custom_call.1} parent=58 // pred_fallthru
          _
      $region59: #{tpu_custom_call.1} parent=5 // pred_fallthru
        _
    $region6: #{tpu_custom_call.1} parent=1 // loop_footer
      %s26 = sadd.s32 1, %s22
    $region7: #{tpu_custom_call.1} parent=1 // loop_footer_branch
      %21 = sbr.rel target = $region3
    $region8: #{tpu_custom_call.1} parent=1 // loop_exit
      _
    %781 = vsyncpa [#allocation11], 1
    %s782 = scalar_lea.sflag [#allocation11], 1
    %783 = vsyncpa %s782, 1
    %784 = vsyncpa [#allocation14], 1
    %s785 = scalar_lea.sflag [#allocation14], 1
    %786 = vsyncpa %s785, 1
    %787 = vsyncpa [#allocation12], 1
    %s788 = scalar_lea.sflag [#allocation12], 1
    %789 = vsyncpa %s788, 1

</llo_original>
